<compile_context>
chip_gen: v5e
topology: v5e:2x2
jax: 0.10.0
libtpu: 0.0.40
codegen_flags: <defaults>
</compile_context>

<pallas_src>
import numpy as np
import jax
import jax.numpy as jnp
from jax.experimental import pallas as pl
from jax.experimental.pallas import tpu as pltpu

_LANE = 128
_SUBLANE = 8


def _round_up(x, m):
    return ((x + m - 1) // m) * m


# ---------------------------------------------------------------------------
# Host-side static interpolation setup (mirrors the torch module's math/RNG).
# ---------------------------------------------------------------------------
def _build_p_stream(T, Tpad_out, scaling):
    """Clamped fractional source position per output column; sentinel -2.0 on
    zero-padded columns.  RNG draw order matches the torch module exactly."""
    output_size = int(T * scaling)
    ref = (np.arange(output_size, dtype=np.float32) / np.float32(scaling)).astype(np.float32)
    p_valid = np.minimum(ref, np.float32(T - 1))   # reproduces ref2 = min(ref1+1, T-1)
    p = np.full(Tpad_out, -2.0, np.float32)
    if output_size > T:
        off = (output_size - T) // 2
        p[:T] = p_valid[off:off + T]
    else:
        diff = T - output_size
        # Matches the torch module: pad_left uses the *global* np.random stream.
        pad_left = int(np.random.uniform() * diff)
        p[pad_left:pad_left + output_size] = p_valid
    return p, output_size


def _compute_bases(p_grp, TN, Tsrc_pad):
    """Per (target, tile) 128-aligned source-window start + window size TK."""
    Gg, Tpad_out = p_grp.shape
    ntiles = Tpad_out // TN
    bases = np.zeros((Gg, ntiles), np.int32)
    span = 1
    for g in range(Gg):
        for j in range(ntiles):
            pj = p_grp[g, j * TN:(j + 1) * TN]
            valid = pj > -1.0
            if not valid.any():
                continue
            lo = int(np.floor(pj[valid].min()))
            hi = int(np.ceil(pj[valid].max()))
            lo_al = (lo // _LANE) * _LANE
            bases[g, j] = lo_al
            span = max(span, hi - lo_al + 1)
    TK = min(_round_up(span, _LANE), Tsrc_pad)
    # Keep the window inside the padded source; base only moves down so the
    # [min_src, max_src] range stays covered.
    bases = np.minimum(bases, Tsrc_pad - TK).astype(np.int32)
    return bases.reshape(-1), TK


# ---------------------------------------------------------------------------
# Pallas kernel: per (target g, output tile j) DMA an (C, TK) source window,
# build a banded (TK, TN) triangular-kernel weight block, one matmul each for
# signal and mask.
# ---------------------------------------------------------------------------
def _timescale_group(wav_g, mask_g, p_g, bases, TK, TN, out_dtypes,
                     matmul_dtype=jnp.float32):
    Gg, C, Tsrc_pad = wav_g.shape
    Tpad_out = p_g.shape[-1]
    ntiles = Tpad_out // TN
    Cr = max(_SUBLANE, _round_up(C, _SUBLANE))
    mm_precision = jax.lax.Precision.HIGHEST if matmul_dtype == jnp.float32 else None

    def kernel(bases_ref, wav_hbm, mask_hbm, p_ref, sig_ref, msk_ref,
               win_s, win_m, sem):
        g = pl.program_id(0)
        j = pl.program_id(1)
        base = pl.multiple_of(bases_ref[g * ntiles + j], _LANE)  # 128-aligned

        # Windowed DMA of only the (C, TK) source rows this tile needs.
        # Scratch rows [C, Cr) are never DMA'd; they only feed discarded
        # output rows, so they may stay uninitialized.
        cp_s = pltpu.make_async_copy(wav_hbm.at[g, pl.ds(0, C), pl.ds(base, TK)],
                                     win_s.at[pl.ds(0, C), :], sem.at[0])
        cp_m = pltpu.make_async_copy(mask_hbm.at[g, pl.ds(0, C), pl.ds(base, TK)],
                                     win_m.at[pl.ds(0, C), :], sem.at[1])
        cp_s.start()
        cp_m.start()

        # Triangular interpolation weights (overlaps with the DMAs above):
        #   W[k, n] = max(0, 1 - |(base + k) - p[n]|)
        # equals (1-r) at ref1 and r at ref1+1 (p pre-clamped to T-1 handles
        # the boundary); padded columns carry p = -2 => zero column.
        rows = (base + jax.lax.broadcasted_iota(jnp.int32, (TK, 1), 0)
                ).astype(jnp.float32)
        W = jnp.maximum(1.0 - jnp.abs(rows - p_ref[...]), 0.0)
        if matmul_dtype != jnp.float32:
            W = W.astype(matmul_dtype)

        cp_s.wait()
        cp_m.wait()

        lhs_s = win_s[...].astype(matmul_dtype)
        lhs_m = win_m[...].astype(matmul_dtype)
        res_s = jnp.dot(lhs_s, W, preferred_element_type=jnp.float32,
                        precision=mm_precision)
        res_m = jnp.dot(lhs_m, W, preferred_element_type=jnp.float32,
                        precision=mm_precision)
        sig_ref[...] = res_s[:C, :].astype(sig_ref.dtype)
        msk_ref[...] = res_m[:C, :].astype(msk_ref.dtype)

    # Explicit VMEM budget: W temporaries + two windows + pipelined p/out blocks.
    est = (3 * TK * TN * 4
           + 2 * Cr * TK * 4
           + 2 * 2 * Cr * TN * 4
           + 2 * _SUBLANE * TN * 4
           + (8 << 20))
    vmem_limit = int(max(16 << 20, min(est, 64 << 20)))

    grid_spec = pltpu.PrefetchScalarGridSpec(
        num_scalar_prefetch=1,
        grid=(Gg, ntiles),
        in_specs=[
            pl.BlockSpec(memory_space=pl.ANY),                       # wav rows (HBM)
            pl.BlockSpec(memory_space=pl.ANY),                       # mask rows (HBM)
            pl.BlockSpec((None, 1, TN), lambda g, j, b: (g, 0, j)),  # p stream
        ],
        out_specs=[
            pl.BlockSpec((None, C, TN), lambda g, j, b: (g, 0, j)),
            pl.BlockSpec((None, C, TN), lambda g, j, b: (g, 0, j)),
        ],
        scratch_shapes=[
            pltpu.VMEM((Cr, TK), jnp.float32),
            pltpu.VMEM((Cr, TK), jnp.float32),
            pltpu.SemaphoreType.DMA((2,)),
        ],
    )

    return pl.pallas_call(
        kernel,
        out_shape=(jax.ShapeDtypeStruct((Gg, C, Tpad_out), out_dtypes[0]),
                   jax.ShapeDtypeStruct((Gg, C, Tpad_out), out_dtypes[1])),
        grid_spec=grid_spec,
        compiler_params=pltpu.CompilerParams(
            dimension_semantics=("parallel", "arbitrary"),
            vmem_limit_bytes=vmem_limit),
    )(bases, wav_g, mask_g, p_g)


# ---------------------------------------------------------------------------
# Forward wrapper (JAX/Pallas equivalent of TimeScale.forward).
# ---------------------------------------------------------------------------
def time_scale_forward(samples, scale=2.0, target=1, seed=42, rngnp=None,
                       tile_n=512, matmul_dtype=jnp.float32):
    rngnp = rngnp if rngnp is not None else np.random.default_rng(seed=seed)

    raw_wav = jnp.asarray(samples['raw_wav'])
    if 'padding_mask' in samples and samples['padding_mask'] is not None:
        masks = jnp.asarray(samples['padding_mask'])
    else:
        masks = jnp.ones_like(raw_wav)

    if raw_wav.ndim == 2:
        raw_wav = raw_wav[:, None, :]
        masks = masks[:, None, :]

    B, C, T = raw_wav.shape
    targets = list(range(B)) if target == -1 else [int(target)]

    # Lane-dense tiling: TN multiple of 128; output padded to multiple of TN,
    # source padded only to multiple of 128.
    TN = _round_up(min(int(tile_n), _round_up(T, _LANE)), _LANE)
    Tpad_out = _round_up(T, TN)
    Tsrc_pad = _round_up(T, _LANE)

    # Host-side RNG draws in the exact per-target order of the torch module
    # (scaling from rngnp, then pad_left from the global np.random stream).
    per_target = []
    for t in targets:
        scaling = float(np.power(scale, rngnp.uniform(-1, 1)))
        p, output_size = _build_p_stream(T, Tpad_out, scaling)
        per_target.append((t, p, output_size))

    # Group by scaling regime so upsampled targets get a smaller TK.
    groups = [[(t, p) for (t, p, o) in per_target if o > T],
              [(t, p) for (t, p, o) in per_target if o <= T]]

    for members in groups:
        if not members:
            continue
        tgt = np.asarray([t for t, _ in members], np.int32)
        p_grp = np.stack([p for _, p in members], axis=0)            # (Gg, Tpad_out)
        bases, TK = _compute_bases(p_grp, TN, Tsrc_pad)

        pad = ((0, 0), (0, 0), (0, Tsrc_pad - T))
        wav_g = jnp.pad(raw_wav[tgt].astype(jnp.float32), pad)
        mask_g = jnp.pad(masks[tgt].astype(jnp.float32), pad)

        sig, msk = _timescale_group(
            wav_g, mask_g,
            jnp.asarray(p_grp).reshape(len(members), 1, Tpad_out),
            jnp.asarray(bases), TK, TN,
            (raw_wav.dtype, masks.dtype), matmul_dtype)

        raw_wav = raw_wav.at[tgt].set(sig[:, :, :T])
        masks = masks.at[tgt].set(msk[:, :, :T])

    if raw_wav.ndim == 3 and raw_wav.shape[1] == 1:
        raw_wav = raw_wav[:, 0, :]
        masks = masks[:, 0, :]

    samples['raw_wav'] = raw_wav
    samples['padding_mask'] = masks
    return samples


# ---------------------------------------------------------------------------
# Pure-numpy reference (mirrors the torch module, same RNG draw order).
# ---------------------------------------------------------------------------
def _reference_timescale(raw_wav, masks, scale, targets, rng):
    raw_wav = np.array(raw_wav, np.float32, copy=True)
    masks = np.array(masks, np.float32, copy=True)
    squeezed = raw_wav.ndim == 2
    if squeezed:
        raw_wav = raw_wav[:, None, :]
        masks = masks[:, None, :]
    _, _, T = raw_wav.shape
    for t in targets:
        scaling = np.power(scale, rng.uniform(-1, 1))
        output_size = int(T * scaling)
        ref = (np.arange(output_size, dtype=np.float32) / np.float32(scaling)).astype(np.float32)
        ref1 = ref.astype(np.int64)
        ref2 = np.minimum(ref1 + 1, T - 1)
        r = ref - ref1.astype(np.float32)
        ss = raw_wav[t][:, ref1] * (1.0 - r) + raw_wav[t][:, ref2] * r
        sm = masks[t][:, ref1] * (1.0 - r) + masks[t][:, ref2] * r
        if output_size > T:
            off = (output_size - T) // 2
            ss = ss[:, off:off + T]
            sm = sm[:, off:off + T]
        else:
            diff = T - output_size
            pad_left = int(np.random.uniform() * diff)
            pad_right = diff - pad_left
            ss = np.pad(ss, ((0, 0), (pad_left, pad_right)))
            sm = np.pad(sm, ((0, 0), (pad_left, pad_right)))
        raw_wav[t] = ss
        masks[t] = sm
    if squeezed:
        raw_wav = raw_wav[:, 0, :]
        masks = masks[:, 0, :]
    return raw_wav, masks


if __name__ == "__main__":
    key = jax.random.PRNGKey(0)

    # --- case 1: 2-D wav (B, T), single target (module defaults) ---
    B, T = 2, 16
    raw_wav = jax.random.normal(key, (B, T), dtype=jnp.float32)
    padding_mask = jnp.ones((B, T), dtype=jnp.float32)
    raw_np = np.asarray(raw_wav)
    mask_np = np.asarray(padding_mask)

    np.random.seed(0)  # global stream used for pad_left, as in the torch code
    out = time_scale_forward({'raw_wav': raw_wav, 'padding_mask': padding_mask},
                             scale=2.0, target=1, seed=42)
    out_wav = np.asarray(jax.block_until_ready(out['raw_wav']))
    out_mask = np.asarray(jax.block_until_ready(out['padding_mask']))

    np.random.seed(0)
    ref_wav, ref_mask = _reference_timescale(raw_np, mask_np, scale=2.0,
                                             targets=[1],
                                             rng=np.random.default_rng(seed=42))
    assert np.allclose(out_wav[0], raw_np[0], atol=1e-6)             # untouched row
    assert np.allclose(out_wav, ref_wav, rtol=1e-3, atol=1e-3), \
        float(np.abs(out_wav - ref_wav).max())
    assert np.allclose(out_mask, ref_mask, rtol=1e-3, atol=1e-3), \
        float(np.abs(out_mask - ref_mask).max())

    # --- case 2: 3-D wav (B, C, T), all targets, multiple time tiles ---
    B2, C2, T2 = 2, 4, 300
    k1, _ = jax.random.split(key)
    wav2 = jax.random.normal(k1, (B2, C2, T2), dtype=jnp.float32)
    mask2 = jnp.ones((B2, C2, T2), dtype=jnp.float32)
    wav2_np = np.asarray(wav2)
    mask2_np = np.asarray(mask2)

    np.random.seed(1)
    out2 = time_scale_forward({'raw_wav': wav2, 'padding_mask': mask2},
                              scale=2.0, target=-1, seed=7, tile_n=128)
    o2w = np.asarray(jax.block_until_ready(out2['raw_wav']))
    o2m = np.asarray(jax.block_until_ready(out2['padding_mask']))

    np.random.seed(1)
    r2w, r2m = _reference_timescale(wav2_np, mask2_np, scale=2.0,
                                    targets=list(range(B2)),
                                    rng=np.random.default_rng(seed=7))
    assert np.allclose(o2w, r2w, rtol=1e-3, atol=1e-3), \
        float(np.abs(o2w - r2w).max())
    assert np.allclose(o2m, r2m, rtol=1e-3, atol=1e-3), \
        float(np.abs(o2m - r2m).max())

    print("KERNEL_OK")
</pallas_src>

<mosaic_0001>
module attributes {stable_mosaic.version = 11 : i64} {
  func.func @kernel(%arg0: i32, %arg1: i32, %arg2: memref<1xi32, #tpu.memory_space<smem>>, %arg3: memref<1x1x128xf32, #tpu.memory_space<any>>, %arg4: memref<1x1x128xf32, #tpu.memory_space<any>>, %arg5: memref<1x1x128xf32, #tpu.memory_space<vmem>>, %arg6: memref<1x1x128xf32, #tpu.memory_space<vmem>>, %arg7: memref<1x1x128xf32, #tpu.memory_space<vmem>>, %arg8: memref<8x128xf32, #tpu.memory_space<vmem>>, %arg9: memref<8x128xf32, #tpu.memory_space<vmem>>, %arg10: memref<2x!tpu.dma_semaphore, #tpu.memory_space<semaphore_mem>>) attributes {dimension_semantics = [#tpu.dimension_semantics<parallel>, #tpu.dimension_semantics<arbitrary>], iteration_bounds = array<i64: 1, 1>, scalar_prefetch = 1 : i64, scratch_operands = 3 : i64, tpu.core_type = #tpu.core_type<tc>, window_params = [{}, {}, {transform_indices = @transform_2, window_bounds = array<i64: 1, 1, 128>}, {transform_indices = @transform_3, window_bounds = array<i64: 1, 1, 128>}, {transform_indices = @transform_4, window_bounds = array<i64: 1, 1, 128>}]} {
    %c1_i32 = arith.constant 1 : i32
    %0 = arith.muli %arg0, %c1_i32 : i32
    %1 = arith.addi %0, %arg1 : i32
    %2 = arith.index_cast %1 : i32 to index
    %3 = memref.load %arg2[%2] : memref<1xi32, #tpu.memory_space<smem>>
    %4 = tpu.assume_multiple %3, 128 : i32
    %c0_i32 = arith.constant 0 : i32
    %c0_i32_0 = arith.constant 0 : i32
    %5 = tpu.memref_slice %arg3[%arg0, %c0_i32_0, %4] : memref<1x1x128xf32, #tpu.memory_space<any>> -> memref<1x1x128xf32, #tpu.memory_space<any>>
    %6 = tpu.memref_squeeze %5 : memref<1x1x128xf32, #tpu.memory_space<any>> -> memref<1x128xf32, #tpu.memory_space<any>>
    %c0_i32_1 = arith.constant 0 : i32
    %c0_i32_2 = arith.constant 0 : i32
    %7 = tpu.memref_slice %arg8[%c0_i32_1, %c0_i32_2] : memref<8x128xf32, #tpu.memory_space<vmem>> -> memref<1x128xf32, #tpu.memory_space<vmem>>
    %8 = tpu.memref_slice %arg10[%c0_i32] : memref<2x!tpu.dma_semaphore, #tpu.memory_space<semaphore_mem>> -> memref<1x!tpu.dma_semaphore, #tpu.memory_space<semaphore_mem>>
    %9 = tpu.memref_squeeze %8 : memref<1x!tpu.dma_semaphore, #tpu.memory_space<semaphore_mem>> -> memref<!tpu.dma_semaphore, #tpu.memory_space<semaphore_mem>>
    tpu.enqueue_dma source(%6 : memref<1x128xf32, #tpu.memory_space<any>>) target(%7 : memref<1x128xf32, #tpu.memory_space<vmem>>) target_semaphore(%9 : memref<!tpu.dma_semaphore, #tpu.memory_space<semaphore_mem>>)
    %c1_i32_3 = arith.constant 1 : i32
    %c0_i32_4 = arith.constant 0 : i32
    %10 = tpu.memref_slice %arg4[%arg0, %c0_i32_4, %4] : memref<1x1x128xf32, #tpu.memory_space<any>> -> memref<1x1x128xf32, #tpu.memory_space<any>>
    %11 = tpu.memref_squeeze %10 : memref<1x1x128xf32, #tpu.memory_space<any>> -> memref<1x128xf32, #tpu.memory_space<any>>
    %c0_i32_5 = arith.constant 0 : i32
    %c0_i32_6 = arith.constant 0 : i32
    %12 = tpu.memref_slice %arg9[%c0_i32_5, %c0_i32_6] : memref<8x128xf32, #tpu.memory_space<vmem>> -> memref<1x128xf32, #tpu.memory_space<vmem>>
    %13 = tpu.memref_slice %arg10[%c1_i32_3] : memref<2x!tpu.dma_semaphore, #tpu.memory_space<semaphore_mem>> -> memref<1x!tpu.dma_semaphore, #tpu.memory_space<semaphore_mem>>
    %14 = tpu.memref_squeeze %13 : memref<1x!tpu.dma_semaphore, #tpu.memory_space<semaphore_mem>> -> memref<!tpu.dma_semaphore, #tpu.memory_space<semaphore_mem>>
    tpu.enqueue_dma source(%11 : memref<1x128xf32, #tpu.memory_space<any>>) target(%12 : memref<1x128xf32, #tpu.memory_space<vmem>>) target_semaphore(%14 : memref<!tpu.dma_semaphore, #tpu.memory_space<semaphore_mem>>)
    %15 = tpu.iota {dimensions = array<i32: 0>} : vector<128x1xi32>
    %16 = vector.broadcast %4 : i32 to vector<128x1xi32>
    %17 = arith.addi %16, %15 : vector<128x1xi32>
    %18 = arith.sitofp %17 : vector<128x1xi32> to vector<128x1xf32>
    %c0 = arith.constant 0 : index
    %c0_7 = arith.constant 0 : index
    %c0_8 = arith.constant 0 : index
    %19 = vector.load %arg5[%c0, %c0_7, %c0_8] : memref<1x1x128xf32, #tpu.memory_space<vmem>>, vector<1x1x128xf32>
    %20 = vector.shape_cast %19 : vector<1x1x128xf32> to vector<1x128xf32>
    %21 = vector.broadcast %18 : vector<128x1xf32> to vector<128x128xf32>
    %22 = vector.broadcast %20 : vector<1x128xf32> to vector<128x128xf32>
    %23 = arith.subf %21, %22 : vector<128x128xf32>
    %24 = math.absf %23 : vector<128x128xf32>
    %cst = arith.constant 1.000000e+00 : f32
    %25 = vector.broadcast %cst : f32 to vector<128x128xf32>
    %26 = arith.subf %25, %24 : vector<128x128xf32>
    %cst_9 = arith.constant 0.000000e+00 : f32
    %27 = vector.broadcast %cst_9 : f32 to vector<128x128xf32>
    %28 = arith.maximumf %26, %27 : vector<128x128xf32>
    %c0_i32_10 = arith.constant 0 : i32
    %c0_i32_11 = arith.constant 0 : i32
    %29 = tpu.memref_slice %arg3[%arg0, %c0_i32_11, %4] : memref<1x1x128xf32, #tpu.memory_space<any>> -> memref<1x1x128xf32, #tpu.memory_space<any>>
    %30 = tpu.memref_squeeze %29 : memref<1x1x128xf32, #tpu.memory_space<any>> -> memref<1x128xf32, #tpu.memory_space<any>>
    %c0_i32_12 = arith.constant 0 : i32
    %c0_i32_13 = arith.constant 0 : i32
    %31 = tpu.memref_slice %arg8[%c0_i32_12, %c0_i32_13] : memref<8x128xf32, #tpu.memory_space<vmem>> -> memref<1x128xf32, #tpu.memory_space<vmem>>
    %32 = tpu.memref_slice %arg10[%c0_i32_10] : memref<2x!tpu.dma_semaphore, #tpu.memory_space<semaphore_mem>> -> memref<1x!tpu.dma_semaphore, #tpu.memory_space<semaphore_mem>>
    %33 = tpu.memref_squeeze %32 : memref<1x!tpu.dma_semaphore, #tpu.memory_space<semaphore_mem>> -> memref<!tpu.dma_semaphore, #tpu.memory_space<semaphore_mem>>
    tpu.wait_dma2 semaphore(%33 : memref<!tpu.dma_semaphore, #tpu.memory_space<semaphore_mem>>) src(%30 : memref<1x128xf32, #tpu.memory_space<any>>) dst(%31 : memref<1x128xf32, #tpu.memory_space<vmem>>)
    %c1_i32_14 = arith.constant 1 : i32
    %c0_i32_15 = arith.constant 0 : i32
    %34 = tpu.memref_slice %arg4[%arg0, %c0_i32_15, %4] : memref<1x1x128xf32, #tpu.memory_space<any>> -> memref<1x1x128xf32, #tpu.memory_space<any>>
    %35 = tpu.memref_squeeze %34 : memref<1x1x128xf32, #tpu.memory_space<any>> -> memref<1x128xf32, #tpu.memory_space<any>>
    %c0_i32_16 = arith.constant 0 : i32
    %c0_i32_17 = arith.constant 0 : i32
    %36 = tpu.memref_slice %arg9[%c0_i32_16, %c0_i32_17] : memref<8x128xf32, #tpu.memory_space<vmem>> -> memref<1x128xf32, #tpu.memory_space<vmem>>
    %37 = tpu.memref_slice %arg10[%c1_i32_14] : memref<2x!tpu.dma_semaphore, #tpu.memory_space<semaphore_mem>> -> memref<1x!tpu.dma_semaphore, #tpu.memory_space<semaphore_mem>>
    %38 = tpu.memref_squeeze %37 : memref<1x!tpu.dma_semaphore, #tpu.memory_space<semaphore_mem>> -> memref<!tpu.dma_semaphore, #tpu.memory_space<semaphore_mem>>
    tpu.wait_dma2 semaphore(%38 : memref<!tpu.dma_semaphore, #tpu.memory_space<semaphore_mem>>) src(%35 : memref<1x128xf32, #tpu.memory_space<any>>) dst(%36 : memref<1x128xf32, #tpu.memory_space<vmem>>)
    %c0_18 = arith.constant 0 : index
    %c0_19 = arith.constant 0 : index
    %39 = vector.load %arg8[%c0_18, %c0_19] : memref<8x128xf32, #tpu.memory_space<vmem>>, vector<8x128xf32>
    %c0_20 = arith.constant 0 : index
    %c0_21 = arith.constant 0 : index
    %40 = vector.load %arg9[%c0_20, %c0_21] : memref<8x128xf32, #tpu.memory_space<vmem>>, vector<8x128xf32>
    %cst_22 = arith.constant dense<0.000000e+00> : vector<8x128xf32>
    %41 = tpu.matmul %39, %28, %cst_22 {dimension_numbers = #tpu.dot_dimension_numbers<[1], [0], [0], [1], [0, 0, 1, 1], [], []>, precision = #tpu.contract_precision<fp32>} : vector<8x128xf32>, vector<128x128xf32>, vector<8x128xf32> -> vector<8x128xf32>
    %cst_23 = arith.constant dense<0.000000e+00> : vector<8x128xf32>
    %42 = tpu.matmul %40, %28, %cst_23 {dimension_numbers = #tpu.dot_dimension_numbers<[1], [0], [0], [1], [0, 0, 1, 1], [], []>, precision = #tpu.contract_precision<fp32>} : vector<8x128xf32>, vector<128x128xf32>, vector<8x128xf32> -> vector<8x128xf32>
    %43 = vector.extract_strided_slice %41 {offsets = [0, 0], sizes = [1, 128], strides = [1, 1]} : vector<8x128xf32> to vector<1x128xf32>
    %c0_24 = arith.constant 0 : index
    %c0_25 = arith.constant 0 : index
    %c0_26 = arith.constant 0 : index
    %44 = vector.load %arg6[%c0_24, %c0_25, %c0_26] : memref<1x1x128xf32, #tpu.memory_space<vmem>>, vector<1x1x128xf32>
    %45 = vector.shape_cast %44 : vector<1x1x128xf32> to vector<1x128xf32>
    %46 = vector.shape_cast %43 : vector<1x128xf32> to vector<1x1x128xf32>
    tpu.vector_store %arg6[%c0_24, %c0_25, %c0_26], %46 {strides = array<i32>} : memref<1x1x128xf32, #tpu.memory_space<vmem>>, vector<1x1x128xf32>,
    %47 = vector.extract_strided_slice %42 {offsets = [0, 0], sizes = [1, 128], strides = [1, 1]} : vector<8x128xf32> to vector<1x128xf32>
    %c0_27 = arith.constant 0 : index
    %c0_28 = arith.constant 0 : index
    %c0_29 = arith.constant 0 : index
    %48 = vector.load %arg7[%c0_27, %c0_28, %c0_29] : memref<1x1x128xf32, #tpu.memory_space<vmem>>, vector<1x1x128xf32>
    %49 = vector.shape_cast %48 : vector<1x1x128xf32> to vector<1x128xf32>
    %50 = vector.shape_cast %47 : vector<1x128xf32> to vector<1x1x128xf32>
    tpu.vector_store %arg7[%c0_27, %c0_28, %c0_29], %50 {strides = array<i32>} : memref<1x1x128xf32, #tpu.memory_space<vmem>>, vector<1x1x128xf32>,
    return
  }
  func.func @transform_2(%arg0: i32, %arg1: i32, %arg2: memref<1xi32, #tpu.memory_space<smem>>) -> (i32, i32, i32) {
    %c0_i32 = arith.constant 0 : i32
    %c0_i32_0 = arith.constant 0 : i32
    return %arg0, %c0_i32, %arg1 : i32, i32, i32
  }
  func.func @transform_3(%arg0: i32, %arg1: i32, %arg2: memref<1xi32, #tpu.memory_space<smem>>) -> (i32, i32, i32) {
    %c0_i32 = arith.constant 0 : i32
    %c0_i32_0 = arith.constant 0 : i32
    return %arg0, %c0_i32, %arg1 : i32, i32, i32
  }
  func.func @transform_4(%arg0: i32, %arg1: i32, %arg2: memref<1xi32, #tpu.memory_space<smem>>) -> (i32, i32, i32) {
    %c0_i32 = arith.constant 0 : i32
    %c0_i32_0 = arith.constant 0 : i32
    return %arg0, %c0_i32, %arg1 : i32, i32, i32
  }
}

</mosaic_0001>

<llo_original>
// kernel: tpu_custom_call.1
$region0: #{tpu_custom_call.1}
  #allocation0 [shape = 'u32[]', space=smem, size = 0x4, offset = 0x4, fixed_abs, tag = 'smem constant byte address 0x4 - core index']
  #allocation1 [shape = 'u32[72,128]{1,0:T(1,128)}', space=vmem, size = 0x9000, scoped, tag = 'internal scratch']
  #allocation2 [shape = 'f32[8,128]{1,0:T(8,128)}', space=vmem, size = 0x1000, scoped, tag = 'scratch operand']
  #allocation3 [shape = 'f32[8,128]{1,0:T(8,128)}', space=vmem, size = 0x1000, scoped, tag = 'scratch operand']
  #allocation4 [shape = 's32[2]{0}', space=sflag, size = 0x8, scoped, tag = 'scratch operand']
  #allocation5 [shape = 's32[1]{0}', space=sflag, size = 0x4, scoped, tag = 'scoped memory for tpu_custom_call.1']
  #allocation6 [shape = 's32[1]{0:T(128)S(6)}', space=smem, size = 0x200, scoped, tag = 'prefetched SMEM operand 0']
  #allocation11 [shape = 's32[]', space=sflag, size = 0x4, offset = 0, fixed_abs, tag = 'sflag constant byte address 0x0 - dummy sync flag']
  #allocation12 [shape = 's32[]', space=sflag, size = 0x4, offset = 0, fixed_abs, tag = 'sflag constant byte address 0x0 - dummy sync flag']
  %s0 = inlined_call_operand.<no memory space> [shape: s32[1], index: 0, kind: input, shape index: {}]
  %s1 = inlined_call_operand.vmem [shape: f32[1,1,128], index: 1, kind: input, shape index: {}]
  %s2 = inlined_call_operand.vmem [shape: f32[1,1,128], index: 2, kind: input, shape index: {}]
  %s3 = inlined_call_operand.vmem [shape: f32[1,1,128], index: 3, kind: input, shape index: {}]
  %s4 = inlined_call_operand.hbm [shape: f32[1,1,128], index: 4, kind: output, shape index: {0}]
  %s5 = inlined_call_operand.hbm [shape: f32[1,1,128], index: 5, kind: output, shape index: {1}]
  %6 = xla_tuple %s4, %s5
  %s7 = sld [smem:[#allocation0]]
  $region82: #{tpu_custom_call.1} parent=0
    _
  %s9 = ssub.s32 1, %s7
  %s10 = scalar_select 0, %s9, %s7
  %11 = sst [smem:[#allocation6]] %s0
  $region1: #{tpu_custom_call.1} parent=0
    #allocation7 [shape = 'u8[512]{0}', space=vmem, size = 0x400, scoped, tag = 'output window, operand 0, single buffered']
    #allocation8 [shape = 's32[1]{0}', space=sflag, size = 0x4, scoped, tag = 'scoped memory for tpu_custom_call.1']
    #allocation9 [shape = 'u8[512]{0}', space=vmem, size = 0x400, scoped, tag = 'output window, operand 1, single buffered']
    #allocation10 [shape = 's32[1]{0}', space=sflag, size = 0x4, scoped, tag = 'scoped memory for tpu_custom_call.1']
    %12 = vsyncpa [#allocation8], 0
    %13 = vsyncpa [#allocation10], 0
    // Predicated region
    $region2: #{tpu_custom_call.1} parent=1 // pred_check
      _
    $region3: #{tpu_custom_call.1} parent=1 // pred_check_branch
      %15 = sbr.rel (0) target = $region5
    $region4: #{tpu_custom_call.1} parent=1 // pred_region
      _
    $region5: #{tpu_custom_call.1} parent=1 // pred_fallthru
      _
    %s16 = sadd.s32 0, 0
    %s17 = sld [smem:[#allocation6 + %s16]]
    %s18 = sshra.s32 %s17, 7
    %s19 = sand.u32 %s17, 127
    %s20 = sadd.s32 %s18, 0
    %s21 = scalar_lea.vmem %s1, %s20
    // Predicated region
    $region6: #{tpu_custom_call.1} parent=1 // pred_check
      _
    $region7: #{tpu_custom_call.1} parent=1 // pred_check_branch
      %23 = sbr.rel target = $region9
    $region8: #{tpu_custom_call.1} parent=1 // pred_region
      // Predicated region
      $region21: #{tpu_custom_call.1} parent=8 // pred_check
        _
      $region22: #{tpu_custom_call.1} parent=8 // pred_check_branch
        %39 = sbr.rel (0) target = $region24
      $region23: #{tpu_custom_call.1} parent=8 // pred_region
        %s41 = ssub.s32 2, 1
        loop: start=0, step=1, limit=1
        $region25: #{tpu_custom_call.1} parent=23 // loop_pre_header
          _
        $region26: #{tpu_custom_call.1} parent=23 // loop_header
          %s43 = sphi 0, %s47
          %p44 = scmp.ge.s32.totalorder %s43, 1
          %s48 = sphi %s21, %s21
          %s49 = sphi [#allocation2], [#allocation2]
        $region27: #{tpu_custom_call.1} parent=23 // loop_header_branch
          %46 = sbr.rel (%p44) target = $region31
        $region28: #{tpu_custom_call.1} parent=23 // loop_body
          %v50 = vld [vmem:[%s48] sm:%s41]
          %51 = vst [vmem:[%s49] sm:%s41] %v50
        $region29: #{tpu_custom_call.1} parent=23 // loop_footer
          %s47 = sadd.s32 1, %s43
        $region30: #{tpu_custom_call.1} parent=23 // loop_footer_branch
          %42 = sbr.rel target = $region26
        $region31: #{tpu_custom_call.1} parent=23 // loop_exit
          _
      $region24: #{tpu_custom_call.1} parent=8 // pred_fallthru
        _
    $region9: #{tpu_custom_call.1} parent=1 // pred_fallthru
      _
    // Predicated region
    $region10: #{tpu_custom_call.1} parent=1 // pred_check
      _
    $region11: #{tpu_custom_call.1} parent=1 // pred_check_branch
      %25 = sbr.rel (0) target = $region13
    $region12: #{tpu_custom_call.1} parent=1 // pred_region
      %s27 = ssub.s32 2, 1
      loop: start=0, step=1, limit=1
      $region14: #{tpu_custom_call.1} parent=12 // loop_pre_header
        _
      $region15: #{tpu_custom_call.1} parent=12 // loop_header
        %s29 = sphi 0, %s33
        %p30 = scmp.ge.s32.totalorder %s29, 1
        %s34 = sphi %s21, %s21
        %s35 = sphi [#allocation2], [#allocation2]
      $region16: #{tpu_custom_call.1} parent=12 // loop_header_branch
        %32 = sbr.rel (%p30) target = $region20
      $region17: #{tpu_custom_call.1} parent=12 // loop_body
        %v36 = vld [vmem:[%s34] sm:%s27]
        %37 = vst [vmem:[%s35] sm:%s27] %v36
      $region18: #{tpu_custom_call.1} parent=12 // loop_footer
        %s33 = sadd.s32 1, %s29
      $region19: #{tpu_custom_call.1} parent=12 // loop_footer_branch
        %28 = sbr.rel target = $region15
      $region20: #{tpu_custom_call.1} parent=12 // loop_exit
        _
    $region13: #{tpu_custom_call.1} parent=1 // pred_fallthru
      _
    // Predicated region
    $region32: #{tpu_custom_call.1} parent=1 // pred_check
      _
    $region33: #{tpu_custom_call.1} parent=1 // pred_check_branch
      %54 = sbr.rel (0) target = $region35
    $region34: #{tpu_custom_call.1} parent=1 // pred_region
      %55 = vsyncadd [#allocation4], 16
    $region35: #{tpu_custom_call.1} parent=1 // pred_fallthru
      _
    %s56 = scalar_lea.vmem %s2, %s20
    %s57 = scalar_lea.sflag [#allocation4], 1
    // Predicated region
    $region36: #{tpu_custom_call.1} parent=1 // pred_check
      _
    $region37: #{tpu_custom_call.1} parent=1 // pred_check_branch
      %59 = sbr.rel target = $region39
    $region38: #{tpu_custom_call.1} parent=1 // pred_region
      // Predicated region
      $region51: #{tpu_custom_call.1} parent=38 // pred_check
        _
      $region52: #{tpu_custom_call.1} parent=38 // pred_check_branch
        %75 = sbr.rel (0) target = $region54
      $region53: #{tpu_custom_call.1} parent=38 // pred_region
        %s77 = ssub.s32 2, 1
        loop: start=0, step=1, limit=1
        $region55: #{tpu_custom_call.1} parent=53 // loop_pre_header
          _
        $region56: #{tpu_custom_call.1} parent=53 // loop_header
          %s79 = sphi 0, %s83
          %p80 = scmp.ge.s32.totalorder %s79, 1
          %s84 = sphi %s56, %s56
          %s85 = sphi [#allocation3], [#allocation3]
        $region57: #{tpu_custom_call.1} parent=53 // loop_header_branch
          %82 = sbr.rel (%p80) target = $region61
        $region58: #{tpu_custom_call.1} parent=53 // loop_body
          %v86 = vld [vmem:[%s84] sm:%s77]
          %87 = vst [vmem:[%s85] sm:%s77] %v86
        $region59: #{tpu_custom_call.1} parent=53 // loop_footer
          %s83 = sadd.s32 1, %s79
        $region60: #{tpu_custom_call.1} parent=53 // loop_footer_branch
          %78 = sbr.rel target = $region56
        $region61: #{tpu_custom_call.1} parent=53 // loop_exit
          _
      $region54: #{tpu_custom_call.1} parent=38 // pred_fallthru
        _
    $region39: #{tpu_custom_call.1} parent=1 // pred_fallthru
      _
    // Predicated region
    $region40: #{tpu_custom_call.1} parent=1 // pred_check
      _
    $region41: #{tpu_custom_call.1} parent=1 // pred_check_branch
      %61 = sbr.rel (0) target = $region43
    $region42: #{tpu_custom_call.1} parent=1 // pred_region
      %s63 = ssub.s32 2, 1
      loop: start=0, step=1, limit=1
      $region44: #{tpu_custom_call.1} parent=42 // loop_pre_header
        _
      $region45: #{tpu_custom_call.1} parent=42 // loop_header
        %s65 = sphi 0, %s69
        %p66 = scmp.ge.s32.totalorder %s65, 1
        %s70 = sphi %s56, %s56
        %s71 = sphi [#allocation3], [#allocation3]
      $region46: #{tpu_custom_call.1} parent=42 // loop_header_branch
        %68 = sbr.rel (%p66) target = $region50
      $region47: #{tpu_custom_call.1} parent=42 // loop_body
        %v72 = vld [vmem:[%s70] sm:%s63]
        %73 = vst [vmem:[%s71] sm:%s63] %v72
      $region48: #{tpu_custom_call.1} parent=42 // loop_footer
        %s69 = sadd.s32 1, %s65
      $region49: #{tpu_custom_call.1} parent=42 // loop_footer_branch
        %64 = sbr.rel target = $region45
      $region50: #{tpu_custom_call.1} parent=42 // loop_exit
        _
    $region43: #{tpu_custom_call.1} parent=1 // pred_fallthru
      _
    // Predicated region
    $region62: #{tpu_custom_call.1} parent=1 // pred_check
      _
    $region63: #{tpu_custom_call.1} parent=1 // pred_check_branch
      %90 = sbr.rel (0) target = $region65
    $region64: #{tpu_custom_call.1} parent=1 // pred_region
      %91 = vsyncadd %s57, 16
    $region65: #{tpu_custom_call.1} parent=1 // pred_fallthru
      _
    %v92 = vlaneseq
    %v93 = vshrl.u32 %v92, 7
    %v94 = vadd.s32 %v93, 8
    %v95 = vadd.s32 %v93, 16
    %v96 = vadd.s32 %v93, 24
    %v97 = vadd.s32 %v93, 32
    %v98 = vadd.s32 %v93, 40
    %v99 = vadd.s32 %v93, 48
    %v100 = vadd.s32 %v93, 56
    %v101 = vadd.s32 %v93, 64
    %v102 = vadd.s32 %v93, 72
    %v103 = vadd.s32 %v93, 80
    %v104 = vadd.s32 %v93, 88
    %v105 = vadd.s32 %v93, 96
    %v106 = vadd.s32 %v93, 104
    %v107 = vadd.s32 %v93, 112
    %v108 = vadd.s32 %v93, 120
    %v109 = vstv %s17
    %v110 = vadd.s32 %v109, %v93
    %v111 = vadd.s32 %v109, %v94
    %v112 = vadd.s32 %v109, %v95
    %v113 = vadd.s32 %v109, %v96
    %v114 = vadd.s32 %v109, %v97
    %v115 = vadd.s32 %v109, %v98
    %v116 = vadd.s32 %v109, %v99
    %v117 = vadd.s32 %v109, %v100
    %v118 = vadd.s32 %v109, %v101
    %v119 = vadd.s32 %v109, %v102
    %v120 = vadd.s32 %v109, %v103
    %v121 = vadd.s32 %v109, %v104
    %v122 = vadd.s32 %v109, %v105
    %v123 = vadd.s32 %v109, %v106
    %v124 = vadd.s32 %v109, %v107
    %v125 = vadd.s32 %v109, %v108
    %v126 = vcvt.s32.f32 %v110
    %v127 = vcvt.s32.f32 %v111
    %v128 = vcvt.s32.f32 %v112
    %v129 = vcvt.s32.f32 %v113
    %v130 = vcvt.s32.f32 %v114
    %v131 = vcvt.s32.f32 %v115
    %v132 = vcvt.s32.f32 %v116
    %v133 = vcvt.s32.f32 %v117
    %v134 = vcvt.s32.f32 %v118
    %v135 = vcvt.s32.f32 %v119
    %v136 = vcvt.s32.f32 %v120
    %v137 = vcvt.s32.f32 %v121
    %v138 = vcvt.s32.f32 %v122
    %v139 = vcvt.s32.f32 %v123
    %v140 = vcvt.s32.f32 %v124
    %v141 = vcvt.s32.f32 %v125
    %v142 = vld [vmem:[%s3] sm:$0x1]
    %v144 = vperm.slane %v142, 0
    %v146 = vsub.f32 %v126, %v144
    %v147 = vsub.f32 %v127, %v144
    %v148 = vsub.f32 %v128, %v144
    %v149 = vsub.f32 %v129, %v144
    %v150 = vsub.f32 %v130, %v144
    %v151 = vsub.f32 %v131, %v144
    %v152 = vsub.f32 %v132, %v144
    %v153 = vsub.f32 %v133, %v144
    %v154 = vsub.f32 %v134, %v144
    %v155 = vsub.f32 %v135, %v144
    %v156 = vsub.f32 %v136, %v144
    %v157 = vsub.f32 %v137, %v144
    %v158 = vsub.f32 %v138, %v144
    %v159 = vsub.f32 %v139, %v144
    %v160 = vsub.f32 %v140, %v144
    %v161 = vsub.f32 %v141, %v144
    %v162 = vand.u32 2147483647, %v146
    %v163 = vand.u32 2147483647, %v147
    %v164 = vand.u32 2147483647, %v148
    %v165 = vand.u32 2147483647, %v149
    %v166 = vand.u32 2147483647, %v150
    %v167 = vand.u32 2147483647, %v151
    %v168 = vand.u32 2147483647, %v152
    %v169 = vand.u32 2147483647, %v153
    %v170 = vand.u32 2147483647, %v154
    %v171 = vand.u32 2147483647, %v155
    %v172 = vand.u32 2147483647, %v156
    %v173 = vand.u32 2147483647, %v157
    %v174 = vand.u32 2147483647, %v158
    %v175 = vand.u32 2147483647, %v159
    %v176 = vand.u32 2147483647, %v160
    %v177 = vand.u32 2147483647, %v161
    %v178 = vsub.f32 1.0, %v162
    %v179 = vsub.f32 1.0, %v163
    %v180 = vsub.f32 1.0, %v164
    %v181 = vsub.f32 1.0, %v165
    %v182 = vsub.f32 1.0, %v166
    %v183 = vsub.f32 1.0, %v167
    %v184 = vsub.f32 1.0, %v168
    %v185 = vsub.f32 1.0, %v169
    %v186 = vsub.f32 1.0, %v170
    %v187 = vsub.f32 1.0, %v171
    %v188 = vsub.f32 1.0, %v172
    %v189 = vsub.f32 1.0, %v173
    %v190 = vsub.f32 1.0, %v174
    %v191 = vsub.f32 1.0, %v175
    %v192 = vsub.f32 1.0, %v176
    %v193 = vsub.f32 1.0, %v177
    %v194 = vmax.f32 %v178, 0.0
    %v195 = vmax.f32 %v179, 0.0
    %v196 = vmax.f32 %v180, 0.0
    %v197 = vmax.f32 %v181, 0.0
    %v198 = vmax.f32 %v182, 0.0
    %v199 = vmax.f32 %v183, 0.0
    %v200 = vmax.f32 %v184, 0.0
    %v201 = vmax.f32 %v185, 0.0
    %v202 = vmax.f32 %v186, 0.0
    %v203 = vmax.f32 %v187, 0.0
    %v204 = vmax.f32 %v188, 0.0
    %v205 = vmax.f32 %v189, 0.0
    %v206 = vmax.f32 %v190, 0.0
    %v207 = vmax.f32 %v191, 0.0
    %v208 = vmax.f32 %v192, 0.0
    %v209 = vmax.f32 %v193, 0.0
    %s210 = smul.u32 1, 1
    %s211 = sshll.u32 %s210, 4
    %212 = dma.done [#allocation4], %s211
    %s213 = sshll.u32 %s210, 4
    %214 = dma.done %s57, %s213
    %v215 = vld [vmem:[#allocation2] sm:$0xff]
    %v216 = vld [vmem:[#allocation3] sm:$0xff]
    %v217 = vand.u32 %v209, 4294901760
    %218 = vmatpush.msra.mxu0 %v217
    %v219 = vand.u32 %v208, 4294901760
    %220 = vmatpush.msra.mxu0 %v219
    %v221 = vand.u32 %v207, 4294901760
    %222 = vmatpush.msra.mxu0 %v221
    %v223 = vand.u32 %v206, 4294901760
    %224 = vmatpush.msra.mxu0 %v223
    %v225 = vand.u32 %v205, 4294901760
    %226 = vmatpush.msra.mxu0 %v225
    %v227 = vand.u32 %v204, 4294901760
    %228 = vmatpush.msra.mxu0 %v227
    %v229 = vand.u32 %v203, 4294901760
    %230 = vmatpush.msra.mxu0 %v229
    %v231 = vand.u32 %v202, 4294901760
    %232 = vmatpush.msra.mxu0 %v231
    %v233 = vand.u32 %v201, 4294901760
    %234 = vmatpush.msra.mxu0 %v233
    %v235 = vand.u32 %v200, 4294901760
    %236 = vmatpush.msra.mxu0 %v235
    %v237 = vand.u32 %v199, 4294901760
    %238 = vmatpush.msra.mxu0 %v237
    %v239 = vand.u32 %v198, 4294901760
    %240 = vmatpush.msra.mxu0 %v239
    %v241 = vand.u32 %v197, 4294901760
    %242 = vmatpush.msra.mxu0 %v241
    %v243 = vand.u32 %v196, 4294901760
    %244 = vmatpush.msra.mxu0 %v243
    %v245 = vand.u32 %v195, 4294901760
    %246 = vmatpush.msra.mxu0 %v245
    %v247 = vand.u32 %v194, 4294901760
    %248 = vmatpush.msra.mxu0 %v247
    %v249 = vand.u32 %v215, 4294901760
    %v250 = vsub.f32 %v215, %v249
    %v251 = vand.u32 %v250, 4294901760
    %v252 = vsub.f32 %v250, %v251
    %v253 = vand.u32 %v252, 4294901760
    %254 = vmatmul.f32.gmra.mxu0 %v253
    %v255 = vpop.f32.mrf.mxu0
    %v256 = vadd.f32 0.0, %v255
    %257 = vdwg.mxu0
    %v258 = vand.u32 %v209, 4294901760
    %v259 = vsub.f32 %v209, %v258
    %v260 = vand.u32 %v259, 4294901760
    %v261 = vsub.f32 %v259, %v260
    %v262 = vand.u32 %v261, 4294901760
    %263 = vmatpush.msra.mxu0 %v262
    %v264 = vand.u32 %v208, 4294901760
    %v265 = vsub.f32 %v208, %v264
    %v266 = vand.u32 %v265, 4294901760
    %v267 = vsub.f32 %v265, %v266
    %v268 = vand.u32 %v267, 4294901760
    %269 = vmatpush.msra.mxu0 %v268
    %v270 = vand.u32 %v207, 4294901760
    %v271 = vsub.f32 %v207, %v270
    %v272 = vand.u32 %v271, 4294901760
    %v273 = vsub.f32 %v271, %v272
    %v274 = vand.u32 %v273, 4294901760
    %275 = vmatpush.msra.mxu0 %v274
    %v276 = vand.u32 %v206, 4294901760
    %v277 = vsub.f32 %v206, %v276
    %v278 = vand.u32 %v277, 4294901760
    %v279 = vsub.f32 %v277, %v278
    %v280 = vand.u32 %v279, 4294901760
    %281 = vmatpush.msra.mxu0 %v280
    %v282 = vand.u32 %v205, 4294901760
    %v283 = vsub.f32 %v205, %v282
    %v284 = vand.u32 %v283, 4294901760
    %v285 = vsub.f32 %v283, %v284
    %v286 = vand.u32 %v285, 4294901760
    %287 = vmatpush.msra.mxu0 %v286
    %v288 = vand.u32 %v204, 4294901760
    %v289 = vsub.f32 %v204, %v288
    %v290 = vand.u32 %v289, 4294901760
    %v291 = vsub.f32 %v289, %v290
    %v292 = vand.u32 %v291, 4294901760
    %293 = vmatpush.msra.mxu0 %v292
    %v294 = vand.u32 %v203, 4294901760
    %v295 = vsub.f32 %v203, %v294
    %v296 = vand.u32 %v295, 4294901760
    %v297 = vsub.f32 %v295, %v296
    %v298 = vand.u32 %v297, 4294901760
    %299 = vmatpush.msra.mxu0 %v298
    %v300 = vand.u32 %v202, 4294901760
    %v301 = vsub.f32 %v202, %v300
    %v302 = vand.u32 %v301, 4294901760
    %v303 = vsub.f32 %v301, %v302
    %v304 = vand.u32 %v303, 4294901760
    %305 = vmatpush.msra.mxu0 %v304
    %v306 = vand.u32 %v201, 4294901760
    %v307 = vsub.f32 %v201, %v306
    %v308 = vand.u32 %v307, 4294901760
    %v309 = vsub.f32 %v307, %v308
    %v310 = vand.u32 %v309, 4294901760
    %311 = vmatpush.msra.mxu0 %v310
    %v312 = vand.u32 %v200, 4294901760
    %v313 = vsub.f32 %v200, %v312
    %v314 = vand.u32 %v313, 4294901760
    %v315 = vsub.f32 %v313, %v314
    %v316 = vand.u32 %v315, 4294901760
    %317 = vmatpush.msra.mxu0 %v316
    %v318 = vand.u32 %v199, 4294901760
    %v319 = vsub.f32 %v199, %v318
    %v320 = vand.u32 %v319, 4294901760
    %v321 = vsub.f32 %v319, %v320
    %v322 = vand.u32 %v321, 4294901760
    %323 = vmatpush.msra.mxu0 %v322
    %v324 = vand.u32 %v198, 4294901760
    %v325 = vsub.f32 %v198, %v324
    %v326 = vand.u32 %v325, 4294901760
    %v327 = vsub.f32 %v325, %v326
    %v328 = vand.u32 %v327, 4294901760
    %329 = vmatpush.msra.mxu0 %v328
    %v330 = vand.u32 %v197, 4294901760
    %v331 = vsub.f32 %v197, %v330
    %v332 = vand.u32 %v331, 4294901760
    %v333 = vsub.f32 %v331, %v332
    %v334 = vand.u32 %v333, 4294901760
    %335 = vmatpush.msra.mxu0 %v334
    %v336 = vand.u32 %v196, 4294901760
    %v337 = vsub.f32 %v196, %v336
    %v338 = vand.u32 %v337, 4294901760
    %v339 = vsub.f32 %v337, %v338
    %v340 = vand.u32 %v339, 4294901760
    %341 = vmatpush.msra.mxu0 %v340
    %v342 = vand.u32 %v195, 4294901760
    %v343 = vsub.f32 %v195, %v342
    %v344 = vand.u32 %v343, 4294901760
    %v345 = vsub.f32 %v343, %v344
    %v346 = vand.u32 %v345, 4294901760
    %347 = vmatpush.msra.mxu0 %v346
    %v348 = vand.u32 %v194, 4294901760
    %v349 = vsub.f32 %v194, %v348
    %v350 = vand.u32 %v349, 4294901760
    %v351 = vsub.f32 %v349, %v350
    %v352 = vand.u32 %v351, 4294901760
    %353 = vmatpush.msra.mxu0 %v352
    %v354 = vand.u32 %v215, 4294901760
    %355 = vmatmul.f32.gmra.mxu0 %v354
    %v356 = vpop.f32.mrf.mxu0
    %v357 = vadd.f32 %v256, %v356
    %358 = vdwg.mxu0
    %v359 = vand.u32 %v209, 4294901760
    %v360 = vsub.f32 %v209, %v359
    %361 = vmatpush.msra.mxu0 %v360
    %v362 = vand.u32 %v208, 4294901760
    %v363 = vsub.f32 %v208, %v362
    %364 = vmatpush.msra.mxu0 %v363
    %v365 = vand.u32 %v207, 4294901760
    %v366 = vsub.f32 %v207, %v365
    %367 = vmatpush.msra.mxu0 %v366
    %v368 = vand.u32 %v206, 4294901760
    %v369 = vsub.f32 %v206, %v368
    %370 = vmatpush.msra.mxu0 %v369
    %v371 = vand.u32 %v205, 4294901760
    %v372 = vsub.f32 %v205, %v371
    %373 = vmatpush.msra.mxu0 %v372
    %v374 = vand.u32 %v204, 4294901760
    %v375 = vsub.f32 %v204, %v374
    %376 = vmatpush.msra.mxu0 %v375
    %v377 = vand.u32 %v203, 4294901760
    %v378 = vsub.f32 %v203, %v377
    %379 = vmatpush.msra.mxu0 %v378
    %v380 = vand.u32 %v202, 4294901760
    %v381 = vsub.f32 %v202, %v380
    %382 = vmatpush.msra.mxu0 %v381
    %v383 = vand.u32 %v201, 4294901760
    %v384 = vsub.f32 %v201, %v383
    %385 = vmatpush.msra.mxu0 %v384
    %v386 = vand.u32 %v200, 4294901760
    %v387 = vsub.f32 %v200, %v386
    %388 = vmatpush.msra.mxu0 %v387
    %v389 = vand.u32 %v199, 4294901760
    %v390 = vsub.f32 %v199, %v389
    %391 = vmatpush.msra.mxu0 %v390
    %v392 = vand.u32 %v198, 4294901760
    %v393 = vsub.f32 %v198, %v392
    %394 = vmatpush.msra.mxu0 %v393
    %v395 = vand.u32 %v197, 4294901760
    %v396 = vsub.f32 %v197, %v395
    %397 = vmatpush.msra.mxu0 %v396
    %v398 = vand.u32 %v196, 4294901760
    %v399 = vsub.f32 %v196, %v398
    %400 = vmatpush.msra.mxu0 %v399
    %v401 = vand.u32 %v195, 4294901760
    %v402 = vsub.f32 %v195, %v401
    %403 = vmatpush.msra.mxu0 %v402
    %v404 = vand.u32 %v194, 4294901760
    %v405 = vsub.f32 %v194, %v404
    %406 = vmatpush.msra.mxu0 %v405
    %v407 = vand.u32 %v215, 4294901760
    %v408 = vsub.f32 %v215, %v407
    %409 = vmatmul.f32.gmra.mxu0 %v408
    %v410 = vpop.f32.mrf.mxu0
    %v411 = vadd.f32 %v357, %v410
    %412 = vdwg.mxu0
    %v413 = vand.u32 %v209, 4294901760
    %414 = vmatpush.msra.mxu0 %v413
    %v415 = vand.u32 %v208, 4294901760
    %416 = vmatpush.msra.mxu0 %v415
    %v417 = vand.u32 %v207, 4294901760
    %418 = vmatpush.msra.mxu0 %v417
    %v419 = vand.u32 %v206, 4294901760
    %420 = vmatpush.msra.mxu0 %v419
    %v421 = vand.u32 %v205, 4294901760
    %422 = vmatpush.msra.mxu0 %v421
    %v423 = vand.u32 %v204, 4294901760
    %424 = vmatpush.msra.mxu0 %v423
    %v425 = vand.u32 %v203, 4294901760
    %426 = vmatpush.msra.mxu0 %v425
    %v427 = vand.u32 %v202, 4294901760
    %428 = vmatpush.msra.mxu0 %v427
    %v429 = vand.u32 %v201, 4294901760
    %430 = vmatpush.msra.mxu0 %v429
    %v431 = vand.u32 %v200, 4294901760
    %432 = vmatpush.msra.mxu0 %v431
    %v433 = vand.u32 %v199, 4294901760
    %434 = vmatpush.msra.mxu0 %v433
    %v435 = vand.u32 %v198, 4294901760
    %436 = vmatpush.msra.mxu0 %v435
    %v437 = vand.u32 %v197, 4294901760
    %438 = vmatpush.msra.mxu0 %v437
    %v439 = vand.u32 %v196, 4294901760
    %440 = vmatpush.msra.mxu0 %v439
    %v441 = vand.u32 %v195, 4294901760
    %442 = vmatpush.msra.mxu0 %v441
    %v443 = vand.u32 %v194, 4294901760
    %444 = vmatpush.msra.mxu0 %v443
    %v445 = vand.u32 %v215, 4294901760
    %v446 = vsub.f32 %v215, %v445
    %v447 = vand.u32 %v446, 4294901760
    %448 = vmatmul.f32.gmra.mxu0 %v447
    %v449 = vpop.f32.mrf.mxu0
    %v450 = vadd.f32 %v411, %v449
    %451 = vdwg.mxu0
    %v452 = vand.u32 %v209, 4294901760
    %v453 = vsub.f32 %v209, %v452
    %v454 = vand.u32 %v453, 4294901760
    %455 = vmatpush.msra.mxu0 %v454
    %v456 = vand.u32 %v208, 4294901760
    %v457 = vsub.f32 %v208, %v456
    %v458 = vand.u32 %v457, 4294901760
    %459 = vmatpush.msra.mxu0 %v458
    %v460 = vand.u32 %v207, 4294901760
    %v461 = vsub.f32 %v207, %v460
    %v462 = vand.u32 %v461, 4294901760
    %463 = vmatpush.msra.mxu0 %v462
    %v464 = vand.u32 %v206, 4294901760
    %v465 = vsub.f32 %v206, %v464
    %v466 = vand.u32 %v465, 4294901760
    %467 = vmatpush.msra.mxu0 %v466
    %v468 = vand.u32 %v205, 4294901760
    %v469 = vsub.f32 %v205, %v468
    %v470 = vand.u32 %v469, 4294901760
    %471 = vmatpush.msra.mxu0 %v470
    %v472 = vand.u32 %v204, 4294901760
    %v473 = vsub.f32 %v204, %v472
    %v474 = vand.u32 %v473, 4294901760
    %475 = vmatpush.msra.mxu0 %v474
    %v476 = vand.u32 %v203, 4294901760
    %v477 = vsub.f32 %v203, %v476
    %v478 = vand.u32 %v477, 4294901760
    %479 = vmatpush.msra.mxu0 %v478
    %v480 = vand.u32 %v202, 4294901760
    %v481 = vsub.f32 %v202, %v480
    %v482 = vand.u32 %v481, 4294901760
    %483 = vmatpush.msra.mxu0 %v482
    %v484 = vand.u32 %v201, 4294901760
    %v485 = vsub.f32 %v201, %v484
    %v486 = vand.u32 %v485, 4294901760
    %487 = vmatpush.msra.mxu0 %v486
    %v488 = vand.u32 %v200, 4294901760
    %v489 = vsub.f32 %v200, %v488
    %v490 = vand.u32 %v489, 4294901760
    %491 = vmatpush.msra.mxu0 %v490
    %v492 = vand.u32 %v199, 4294901760
    %v493 = vsub.f32 %v199, %v492
    %v494 = vand.u32 %v493, 4294901760
    %495 = vmatpush.msra.mxu0 %v494
    %v496 = vand.u32 %v198, 4294901760
    %v497 = vsub.f32 %v198, %v496
    %v498 = vand.u32 %v497, 4294901760
    %499 = vmatpush.msra.mxu0 %v498
    %v500 = vand.u32 %v197, 4294901760
    %v501 = vsub.f32 %v197, %v500
    %v502 = vand.u32 %v501, 4294901760
    %503 = vmatpush.msra.mxu0 %v502
    %v504 = vand.u32 %v196, 4294901760
    %v505 = vsub.f32 %v196, %v504
    %v506 = vand.u32 %v505, 4294901760
    %507 = vmatpush.msra.mxu0 %v506
    %v508 = vand.u32 %v195, 4294901760
    %v509 = vsub.f32 %v195, %v508
    %v510 = vand.u32 %v509, 4294901760
    %511 = vmatpush.msra.mxu0 %v510
    %v512 = vand.u32 %v194, 4294901760
    %v513 = vsub.f32 %v194, %v512
    %v514 = vand.u32 %v513, 4294901760
    %515 = vmatpush.msra.mxu0 %v514
    %v516 = vand.u32 %v215, 4294901760
    %517 = vmatmul.f32.gmra.mxu0 %v516
    %v518 = vpop.f32.mrf.mxu0
    %v519 = vadd.f32 %v450, %v518
    %520 = vdwg.mxu0
    %v521 = vand.u32 %v209, 4294901760
    %522 = vmatpush.msra.mxu0 %v521
    %v523 = vand.u32 %v208, 4294901760
    %524 = vmatpush.msra.mxu0 %v523
    %v525 = vand.u32 %v207, 4294901760
    %526 = vmatpush.msra.mxu0 %v525
    %v527 = vand.u32 %v206, 4294901760
    %528 = vmatpush.msra.mxu0 %v527
    %v529 = vand.u32 %v205, 4294901760
    %530 = vmatpush.msra.mxu0 %v529
    %v531 = vand.u32 %v204, 4294901760
    %532 = vmatpush.msra.mxu0 %v531
    %v533 = vand.u32 %v203, 4294901760
    %534 = vmatpush.msra.mxu0 %v533
    %v535 = vand.u32 %v202, 4294901760
    %536 = vmatpush.msra.mxu0 %v535
    %v537 = vand.u32 %v201, 4294901760
    %538 = vmatpush.msra.mxu0 %v537
    %v539 = vand.u32 %v200, 4294901760
    %540 = vmatpush.msra.mxu0 %v539
    %v541 = vand.u32 %v199, 4294901760
    %542 = vmatpush.msra.mxu0 %v541
    %v543 = vand.u32 %v198, 4294901760
    %544 = vmatpush.msra.mxu0 %v543
    %v545 = vand.u32 %v197, 4294901760
    %546 = vmatpush.msra.mxu0 %v545
    %v547 = vand.u32 %v196, 4294901760
    %548 = vmatpush.msra.mxu0 %v547
    %v549 = vand.u32 %v195, 4294901760
    %550 = vmatpush.msra.mxu0 %v549
    %v551 = vand.u32 %v194, 4294901760
    %552 = vmatpush.msra.mxu0 %v551
    %v553 = vand.u32 %v215, 4294901760
    %554 = vmatmul.f32.gmra.mxu0 %v553
    %v555 = vpop.f32.mrf.mxu0
    %v556 = vadd.f32 %v519, %v555
    %557 = vdwg.mxu0
    %v558 = vand.u32 %v209, 4294901760
    %559 = vmatpush.msra.mxu0 %v558
    %v560 = vand.u32 %v208, 4294901760
    %561 = vmatpush.msra.mxu0 %v560
    %v562 = vand.u32 %v207, 4294901760
    %563 = vmatpush.msra.mxu0 %v562
    %v564 = vand.u32 %v206, 4294901760
    %565 = vmatpush.msra.mxu0 %v564
    %v566 = vand.u32 %v205, 4294901760
    %567 = vmatpush.msra.mxu0 %v566
    %v568 = vand.u32 %v204, 4294901760
    %569 = vmatpush.msra.mxu0 %v568
    %v570 = vand.u32 %v203, 4294901760
    %571 = vmatpush.msra.mxu0 %v570
    %v572 = vand.u32 %v202, 4294901760
    %573 = vmatpush.msra.mxu0 %v572
    %v574 = vand.u32 %v201, 4294901760
    %575 = vmatpush.msra.mxu0 %v574
    %v576 = vand.u32 %v200, 4294901760
    %577 = vmatpush.msra.mxu0 %v576
    %v578 = vand.u32 %v199, 4294901760
    %579 = vmatpush.msra.mxu0 %v578
    %v580 = vand.u32 %v198, 4294901760
    %581 = vmatpush.msra.mxu0 %v580
    %v582 = vand.u32 %v197, 4294901760
    %583 = vmatpush.msra.mxu0 %v582
    %v584 = vand.u32 %v196, 4294901760
    %585 = vmatpush.msra.mxu0 %v584
    %v586 = vand.u32 %v195, 4294901760
    %587 = vmatpush.msra.mxu0 %v586
    %v588 = vand.u32 %v194, 4294901760
    %589 = vmatpush.msra.mxu0 %v588
    %v590 = vand.u32 %v216, 4294901760
    %v591 = vsub.f32 %v216, %v590
    %v592 = vand.u32 %v591, 4294901760
    %v593 = vsub.f32 %v591, %v592
    %v594 = vand.u32 %v593, 4294901760
    %595 = vmatmul.f32.gmra.mxu0 %v594
    %v596 = vpop.f32.mrf.mxu0
    %v597 = vadd.f32 0.0, %v596
    %598 = vdwg.mxu0
    %v599 = vand.u32 %v209, 4294901760
    %v600 = vsub.f32 %v209, %v599
    %v601 = vand.u32 %v600, 4294901760
    %v602 = vsub.f32 %v600, %v601
    %v603 = vand.u32 %v602, 4294901760
    %604 = vmatpush.msra.mxu0 %v603
    %v605 = vand.u32 %v208, 4294901760
    %v606 = vsub.f32 %v208, %v605
    %v607 = vand.u32 %v606, 4294901760
    %v608 = vsub.f32 %v606, %v607
    %v609 = vand.u32 %v608, 4294901760
    %610 = vmatpush.msra.mxu0 %v609
    %v611 = vand.u32 %v207, 4294901760
    %v612 = vsub.f32 %v207, %v611
    %v613 = vand.u32 %v612, 4294901760
    %v614 = vsub.f32 %v612, %v613
    %v615 = vand.u32 %v614, 4294901760
    %616 = vmatpush.msra.mxu0 %v615
    %v617 = vand.u32 %v206, 4294901760
    %v618 = vsub.f32 %v206, %v617
    %v619 = vand.u32 %v618, 4294901760
    %v620 = vsub.f32 %v618, %v619
    %v621 = vand.u32 %v620, 4294901760
    %622 = vmatpush.msra.mxu0 %v621
    %v623 = vand.u32 %v205, 4294901760
    %v624 = vsub.f32 %v205, %v623
    %v625 = vand.u32 %v624, 4294901760
    %v626 = vsub.f32 %v624, %v625
    %v627 = vand.u32 %v626, 4294901760
    %628 = vmatpush.msra.mxu0 %v627
    %v629 = vand.u32 %v204, 4294901760
    %v630 = vsub.f32 %v204, %v629
    %v631 = vand.u32 %v630, 4294901760
    %v632 = vsub.f32 %v630, %v631
    %v633 = vand.u32 %v632, 4294901760
    %634 = vmatpush.msra.mxu0 %v633
    %v635 = vand.u32 %v203, 4294901760
    %v636 = vsub.f32 %v203, %v635
    %v637 = vand.u32 %v636, 4294901760
    %v638 = vsub.f32 %v636, %v637
    %v639 = vand.u32 %v638, 4294901760
    %640 = vmatpush.msra.mxu0 %v639
    %v641 = vand.u32 %v202, 4294901760
    %v642 = vsub.f32 %v202, %v641
    %v643 = vand.u32 %v642, 4294901760
    %v644 = vsub.f32 %v642, %v643
    %v645 = vand.u32 %v644, 4294901760
    %646 = vmatpush.msra.mxu0 %v645
    %v647 = vand.u32 %v201, 4294901760
    %v648 = vsub.f32 %v201, %v647
    %v649 = vand.u32 %v648, 4294901760
    %v650 = vsub.f32 %v648, %v649
    %v651 = vand.u32 %v650, 4294901760
    %652 = vmatpush.msra.mxu0 %v651
    %v653 = vand.u32 %v200, 4294901760
    %v654 = vsub.f32 %v200, %v653
    %v655 = vand.u32 %v654, 4294901760
    %v656 = vsub.f32 %v654, %v655
    %v657 = vand.u32 %v656, 4294901760
    %658 = vmatpush.msra.mxu0 %v657
    %v659 = vand.u32 %v199, 4294901760
    %v660 = vsub.f32 %v199, %v659
    %v661 = vand.u32 %v660, 4294901760
    %v662 = vsub.f32 %v660, %v661
    %v663 = vand.u32 %v662, 4294901760
    %664 = vmatpush.msra.mxu0 %v663
    %v665 = vand.u32 %v198, 4294901760
    %v666 = vsub.f32 %v198, %v665
    %v667 = vand.u32 %v666, 4294901760
    %v668 = vsub.f32 %v666, %v667
    %v669 = vand.u32 %v668, 4294901760
    %670 = vmatpush.msra.mxu0 %v669
    %v671 = vand.u32 %v197, 4294901760
    %v672 = vsub.f32 %v197, %v671
    %v673 = vand.u32 %v672, 4294901760
    %v674 = vsub.f32 %v672, %v673
    %v675 = vand.u32 %v674, 4294901760
    %676 = vmatpush.msra.mxu0 %v675
    %v677 = vand.u32 %v196, 4294901760
    %v678 = vsub.f32 %v196, %v677
    %v679 = vand.u32 %v678, 4294901760
    %v680 = vsub.f32 %v678, %v679
    %v681 = vand.u32 %v680, 4294901760
    %682 = vmatpush.msra.mxu0 %v681
    %v683 = vand.u32 %v195, 4294901760
    %v684 = vsub.f32 %v195, %v683
    %v685 = vand.u32 %v684, 4294901760
    %v686 = vsub.f32 %v684, %v685
    %v687 = vand.u32 %v686, 4294901760
    %688 = vmatpush.msra.mxu0 %v687
    %v689 = vand.u32 %v194, 4294901760
    %v690 = vsub.f32 %v194, %v689
    %v691 = vand.u32 %v690, 4294901760
    %v692 = vsub.f32 %v690, %v691
    %v693 = vand.u32 %v692, 4294901760
    %694 = vmatpush.msra.mxu0 %v693
    %v695 = vand.u32 %v216, 4294901760
    %696 = vmatmul.f32.gmra.mxu0 %v695
    %v697 = vpop.f32.mrf.mxu0
    %v698 = vadd.f32 %v597, %v697
    %699 = vdwg.mxu0
    %v700 = vand.u32 %v209, 4294901760
    %v701 = vsub.f32 %v209, %v700
    %702 = vmatpush.msra.mxu0 %v701
    %v703 = vand.u32 %v208, 4294901760
    %v704 = vsub.f32 %v208, %v703
    %705 = vmatpush.msra.mxu0 %v704
    %v706 = vand.u32 %v207, 4294901760
    %v707 = vsub.f32 %v207, %v706
    %708 = vmatpush.msra.mxu0 %v707
    %v709 = vand.u32 %v206, 4294901760
    %v710 = vsub.f32 %v206, %v709
    %711 = vmatpush.msra.mxu0 %v710
    %v712 = vand.u32 %v205, 4294901760
    %v713 = vsub.f32 %v205, %v712
    %714 = vmatpush.msra.mxu0 %v713
    %v715 = vand.u32 %v204, 4294901760
    %v716 = vsub.f32 %v204, %v715
    %717 = vmatpush.msra.mxu0 %v716
    %v718 = vand.u32 %v203, 4294901760
    %v719 = vsub.f32 %v203, %v718
    %720 = vmatpush.msra.mxu0 %v719
    %v721 = vand.u32 %v202, 4294901760
    %v722 = vsub.f32 %v202, %v721
    %723 = vmatpush.msra.mxu0 %v722
    %v724 = vand.u32 %v201, 4294901760
    %v725 = vsub.f32 %v201, %v724
    %726 = vmatpush.msra.mxu0 %v725
    %v727 = vand.u32 %v200, 4294901760
    %v728 = vsub.f32 %v200, %v727
    %729 = vmatpush.msra.mxu0 %v728
    %v730 = vand.u32 %v199, 4294901760
    %v731 = vsub.f32 %v199, %v730
    %732 = vmatpush.msra.mxu0 %v731
    %v733 = vand.u32 %v198, 4294901760
    %v734 = vsub.f32 %v198, %v733
    %735 = vmatpush.msra.mxu0 %v734
    %v736 = vand.u32 %v197, 4294901760
    %v737 = vsub.f32 %v197, %v736
    %738 = vmatpush.msra.mxu0 %v737
    %v739 = vand.u32 %v196, 4294901760
    %v740 = vsub.f32 %v196, %v739
    %741 = vmatpush.msra.mxu0 %v740
    %v742 = vand.u32 %v195, 4294901760
    %v743 = vsub.f32 %v195, %v742
    %744 = vmatpush.msra.mxu0 %v743
    %v745 = vand.u32 %v194, 4294901760
    %v746 = vsub.f32 %v194, %v745
    %747 = vmatpush.msra.mxu0 %v746
    %v748 = vand.u32 %v216, 4294901760
    %v749 = vsub.f32 %v216, %v748
    %750 = vmatmul.f32.gmra.mxu0 %v749
    %v751 = vpop.f32.mrf.mxu0
    %v752 = vadd.f32 %v698, %v751
    %753 = vdwg.mxu0
    %v754 = vand.u32 %v209, 4294901760
    %755 = vmatpush.msra.mxu0 %v754
    %v756 = vand.u32 %v208, 4294901760
    %757 = vmatpush.msra.mxu0 %v756
    %v758 = vand.u32 %v207, 4294901760
    %759 = vmatpush.msra.mxu0 %v758
    %v760 = vand.u32 %v206, 4294901760
    %761 = vmatpush.msra.mxu0 %v760
    %v762 = vand.u32 %v205, 4294901760
    %763 = vmatpush.msra.mxu0 %v762
    %v764 = vand.u32 %v204, 4294901760
    %765 = vmatpush.msra.mxu0 %v764
    %v766 = vand.u32 %v203, 4294901760
    %767 = vmatpush.msra.mxu0 %v766
    %v768 = vand.u32 %v202, 4294901760
    %769 = vmatpush.msra.mxu0 %v768
    %v770 = vand.u32 %v201, 4294901760
    %771 = vmatpush.msra.mxu0 %v770
    %v772 = vand.u32 %v200, 4294901760
    %773 = vmatpush.msra.mxu0 %v772
    %v774 = vand.u32 %v199, 4294901760
    %775 = vmatpush.msra.mxu0 %v774
    %v776 = vand.u32 %v198, 4294901760
    %777 = vmatpush.msra.mxu0 %v776
    %v778 = vand.u32 %v197, 4294901760
    %779 = vmatpush.msra.mxu0 %v778
    %v780 = vand.u32 %v196, 4294901760
    %781 = vmatpush.msra.mxu0 %v780
    %v782 = vand.u32 %v195, 4294901760
    %783 = vmatpush.msra.mxu0 %v782
    %v784 = vand.u32 %v194, 4294901760
    %785 = vmatpush.msra.mxu0 %v784
    %v786 = vand.u32 %v216, 4294901760
    %v787 = vsub.f32 %v216, %v786
    %v788 = vand.u32 %v787, 4294901760
    %789 = vmatmul.f32.gmra.mxu0 %v788
    %v790 = vpop.f32.mrf.mxu0
    %v791 = vadd.f32 %v752, %v790
    %792 = vdwg.mxu0
    %v793 = vand.u32 %v209, 4294901760
    %v794 = vsub.f32 %v209, %v793
    %v795 = vand.u32 %v794, 4294901760
    %796 = vmatpush.msra.mxu0 %v795
    %v797 = vand.u32 %v208, 4294901760
    %v798 = vsub.f32 %v208, %v797
    %v799 = vand.u32 %v798, 4294901760
    %800 = vmatpush.msra.mxu0 %v799
    %v801 = vand.u32 %v207, 4294901760
    %v802 = vsub.f32 %v207, %v801
    %v803 = vand.u32 %v802, 4294901760
    %804 = vmatpush.msra.mxu0 %v803
    %v805 = vand.u32 %v206, 4294901760
    %v806 = vsub.f32 %v206, %v805
    %v807 = vand.u32 %v806, 4294901760
    %808 = vmatpush.msra.mxu0 %v807
    %v809 = vand.u32 %v205, 4294901760
    %v810 = vsub.f32 %v205, %v809
    %v811 = vand.u32 %v810, 4294901760
    %812 = vmatpush.msra.mxu0 %v811
    %v813 = vand.u32 %v204, 4294901760
    %v814 = vsub.f32 %v204, %v813
    %v815 = vand.u32 %v814, 4294901760
    %816 = vmatpush.msra.mxu0 %v815
    %v817 = vand.u32 %v203, 4294901760
    %v818 = vsub.f32 %v203, %v817
    %v819 = vand.u32 %v818, 4294901760
    %820 = vmatpush.msra.mxu0 %v819
    %v821 = vand.u32 %v202, 4294901760
    %v822 = vsub.f32 %v202, %v821
    %v823 = vand.u32 %v822, 4294901760
    %824 = vmatpush.msra.mxu0 %v823
    %v825 = vand.u32 %v201, 4294901760
    %v826 = vsub.f32 %v201, %v825
    %v827 = vand.u32 %v826, 4294901760
    %828 = vmatpush.msra.mxu0 %v827
    %v829 = vand.u32 %v200, 4294901760
    %v830 = vsub.f32 %v200, %v829
    %v831 = vand.u32 %v830, 4294901760
    %832 = vmatpush.msra.mxu0 %v831
    %v833 = vand.u32 %v199, 4294901760
    %v834 = vsub.f32 %v199, %v833
    %v835 = vand.u32 %v834, 4294901760
    %836 = vmatpush.msra.mxu0 %v835
    %v837 = vand.u32 %v198, 4294901760
    %v838 = vsub.f32 %v198, %v837
    %v839 = vand.u32 %v838, 4294901760
    %840 = vmatpush.msra.mxu0 %v839
    %v841 = vand.u32 %v197, 4294901760
    %v842 = vsub.f32 %v197, %v841
    %v843 = vand.u32 %v842, 4294901760
    %844 = vmatpush.msra.mxu0 %v843
    %v845 = vand.u32 %v196, 4294901760
    %v846 = vsub.f32 %v196, %v845
    %v847 = vand.u32 %v846, 4294901760
    %848 = vmatpush.msra.mxu0 %v847
    %v849 = vand.u32 %v195, 4294901760
    %v850 = vsub.f32 %v195, %v849
    %v851 = vand.u32 %v850, 4294901760
    %852 = vmatpush.msra.mxu0 %v851
    %v853 = vand.u32 %v194, 4294901760
    %v854 = vsub.f32 %v194, %v853
    %v855 = vand.u32 %v854, 4294901760
    %856 = vmatpush.msra.mxu0 %v855
    %v857 = vand.u32 %v216, 4294901760
    %858 = vmatmul.f32.gmra.mxu0 %v857
    %v859 = vpop.f32.mrf.mxu0
    %v860 = vadd.f32 %v791, %v859
    %861 = vdwg.mxu0
    %v862 = vand.u32 %v209, 4294901760
    %863 = vmatpush.msra.mxu0 %v862
    %v864 = vand.u32 %v208, 4294901760
    %865 = vmatpush.msra.mxu0 %v864
    %v866 = vand.u32 %v207, 4294901760
    %867 = vmatpush.msra.mxu0 %v866
    %v868 = vand.u32 %v206, 4294901760
    %869 = vmatpush.msra.mxu0 %v868
    %v870 = vand.u32 %v205, 4294901760
    %871 = vmatpush.msra.mxu0 %v870
    %v872 = vand.u32 %v204, 4294901760
    %873 = vmatpush.msra.mxu0 %v872
    %v874 = vand.u32 %v203, 4294901760
    %875 = vmatpush.msra.mxu0 %v874
    %v876 = vand.u32 %v202, 4294901760
    %877 = vmatpush.msra.mxu0 %v876
    %v878 = vand.u32 %v201, 4294901760
    %879 = vmatpush.msra.mxu0 %v878
    %v880 = vand.u32 %v200, 4294901760
    %881 = vmatpush.msra.mxu0 %v880
    %v882 = vand.u32 %v199, 4294901760
    %883 = vmatpush.msra.mxu0 %v882
    %v884 = vand.u32 %v198, 4294901760
    %885 = vmatpush.msra.mxu0 %v884
    %v886 = vand.u32 %v197, 4294901760
    %887 = vmatpush.msra.mxu0 %v886
    %v888 = vand.u32 %v196, 4294901760
    %889 = vmatpush.msra.mxu0 %v888
    %v890 = vand.u32 %v195, 4294901760
    %891 = vmatpush.msra.mxu0 %v890
    %v892 = vand.u32 %v194, 4294901760
    %893 = vmatpush.msra.mxu0 %v892
    %v894 = vand.u32 %v216, 4294901760
    %895 = vmatmul.f32.gmra.mxu0 %v894
    %v896 = vpop.f32.mrf.mxu0
    %v897 = vadd.f32 %v860, %v896
    %898 = vdwg.mxu0
    %899 = vst [vmem:[#allocation7] sm:$0x1] %v556
    %900 = vst [vmem:[#allocation9] sm:$0x1] %v897
    // Predicated region
    $region66: #{tpu_custom_call.1} parent=1 // pred_check
      _
    $region67: #{tpu_custom_call.1} parent=1 // pred_check_branch
      %902 = sbr.rel (0) target = $region69
    $region68: #{tpu_custom_call.1} parent=1 // pred_region
      %904 = vsyncadd [#allocation8], 0
      %s906 = sshll.u32 [#allocation7], 4
      %s907 = int_to_ptr.vmem [resolvable:$true] %s906
      %s908 = sshll.u32 %s4, 4
      %s909 = int_to_ptr.hbm [resolvable:$true] %s908
      %911 = dma.vmem_to_hbm [thread:$0]  %s907, 16, %s909, [#allocation8]
    $region69: #{tpu_custom_call.1} parent=1 // pred_fallthru
      _
    // Predicated region
    $region70: #{tpu_custom_call.1} parent=1 // pred_check
      _
    $region71: #{tpu_custom_call.1} parent=1 // pred_check_branch
      %913 = sbr.rel (0) target = $region73
    $region72: #{tpu_custom_call.1} parent=1 // pred_region
      %915 = vsyncadd [#allocation10], 0
      %s917 = sshll.u32 [#allocation9], 4
      %s918 = int_to_ptr.vmem [resolvable:$true] %s917
      %s919 = sshll.u32 %s5, 4
      %s920 = int_to_ptr.hbm [resolvable:$true] %s919
      %922 = dma.vmem_to_hbm [thread:$0]  %s918, 16, %s920, [#allocation10]
    $region73: #{tpu_custom_call.1} parent=1 // pred_fallthru
      _
    // Predicated region
    $region74: #{tpu_custom_call.1} parent=1 // pred_check
      _
    $region75: #{tpu_custom_call.1} parent=1 // pred_check_branch
      %924 = sbr.rel (0) target = $region77
    $region76: #{tpu_custom_call.1} parent=1 // pred_region
      %926 = dma.done [#allocation8], 16
    $region77: #{tpu_custom_call.1} parent=1 // pred_fallthru
      _
    // Predicated region
    $region78: #{tpu_custom_call.1} parent=1 // pred_check
      _
    $region79: #{tpu_custom_call.1} parent=1 // pred_check_branch
      %928 = sbr.rel (0) target = $region81
    $region80: #{tpu_custom_call.1} parent=1 // pred_region
      %930 = dma.done [#allocation10], 16
    $region81: #{tpu_custom_call.1} parent=1 // pred_fallthru
      _
    %931 = vsyncpa [#allocation8], 1
    %932 = vsyncpa [#allocation10], 1
  %933 = vsyncmov [#allocation4]
  %s934 = vpop.sfrf %933
  %p935 = scmp.eq.s32.totalorder %s934, 0
  %p936 = pneg %p935
  %938 = shalt.err (%p936)
  %s939 = scalar_lea.sflag [#allocation4], 1
  %940 = vsyncmov %s939
  %s941 = vpop.sfrf %940
  %p942 = scmp.eq.s32.totalorder %s941, 0
  %p943 = pneg %p942
  %945 = shalt.err (%p943)

</llo_original>
